<compile_context>
chip_gen: v7x
topology: tpu7x:2x2x1
jax: 0.10.0
libtpu: 0.0.40
codegen_flags: <defaults>
</compile_context>

<pallas_src>
import functools

import jax
import jax.numpy as jnp
import numpy as np
from jax.experimental import pallas as pl
from jax.experimental.pallas import tpu as pltpu


def _round_up(x, m):
    return ((x + m - 1) // m) * m


# ----------------------------------------------------------------------------
# Kernel 1: segment mean over neighbor groups (+ fused gcn Linear + relu)
#   out[t] = relu( (sum_j mask[t, j] * embeds[j]) * inv_len[t] @ W + b )   (gcn)
#   out[t] =       (sum_j mask[t, j] * embeds[j]) * inv_len[t]             (else)
# ----------------------------------------------------------------------------
def _seg_mean_kernel(*refs, gcn):
    if gcn:
        mask_ref, emb_ref, inv_ref, w_ref, b_ref, out_ref = refs
    else:
        mask_ref, emb_ref, inv_ref, out_ref = refs

    k = pl.program_id(1)

    @pl.when(k == 0)
    def _():
        out_ref[...] = jnp.zeros_like(out_ref)

    # accumulate directly into the VMEM-resident f32 output block (no scratch)
    out_ref[...] += jnp.dot(mask_ref[...], emb_ref[...],
                            preferred_element_type=jnp.float32)

    @pl.when(k == pl.num_programs(1) - 1)
    def _():
        res = out_ref[...] * inv_ref[...]          # sum -> mean
        if gcn:
            res = jnp.maximum(
                jnp.dot(res, w_ref[...], preferred_element_type=jnp.float32)
                + b_ref[...], 0.0)
        out_ref[...] = res


def seg_mean_gcn(mask, embeds, inv_len, w_gcn, b_gcn, *, gcn, tm=128, tk=512):
    T, M = mask.shape
    D = embeds.shape[1]
    tm = min(tm, _round_up(T, 8))
    tk = min(tk, _round_up(M, 128))
    T_pad = _round_up(T, tm)
    M_pad = _round_up(M, tk)

    mask_p = jnp.zeros((T_pad, M_pad), jnp.float32).at[:T, :M].set(mask)
    emb_p = jnp.zeros((M_pad, D), jnp.float32).at[:M].set(embeds)
    inv_p = jnp.zeros((T_pad, 1), jnp.float32).at[:T].set(inv_len)

    in_specs = [
        pl.BlockSpec((tm, tk), lambda i, k: (i, k)),   # mask tile (streamed)
        pl.BlockSpec((tk, D), lambda i, k: (k, 0)),    # embeds tile (streamed)
        pl.BlockSpec((tm, 1), lambda i, k: (i, 0)),    # 1/len (row-resident)
    ]
    operands = [mask_p, emb_p, inv_p]
    if gcn:
        in_specs += [
            pl.BlockSpec((D, D), lambda i, k: (0, 0)),  # gcn W (fully resident)
            pl.BlockSpec((1, D), lambda i, k: (0, 0)),  # gcn b (fully resident)
        ]
        operands += [w_gcn, b_gcn]

    kernel = functools.partial(_seg_mean_kernel, gcn=gcn)
    out = pl.pallas_call(
        kernel,
        out_shape=jax.ShapeDtypeStruct((T_pad, D), jnp.float32),
        grid_spec=pltpu.PrefetchScalarGridSpec(
            num_scalar_prefetch=0,
            grid=(T_pad // tm, M_pad // tk),            # reduction axis last
            in_specs=in_specs,
            out_specs=pl.BlockSpec((tm, D), lambda i, k: (i, 0)),
        ),
        compiler_params=pltpu.CompilerParams(
            dimension_semantics=("parallel", "arbitrary"),
            vmem_limit_bytes=48 * 1024 * 1024,
        ),
    )(*operands)
    return out[:T]


# ----------------------------------------------------------------------------
# Kernel 2: fused per-sequence gather + concat + length mask
#   seq[i, t] = [ embeds_mean[off[i] + t], ent_sel[i] ]  if t < len[i] else 0
# 8 sequences per grid step; output last dim 2*D (lane-dense stores).
# ----------------------------------------------------------------------------
def _seq_kernel(off_ref, len_ref, emb_ref, ent_ref, out_ref, *, bt, L, D):
    i = pl.program_id(0)
    t_iota = jax.lax.broadcasted_iota(jnp.int32, (L, 1), 0)
    for j in range(bt):                                   # static unroll
        off = off_ref[i * bt + j]
        n = len_ref[i * bt + j]
        emb = emb_ref[pl.ds(off, L), :]                   # (L, D) dynamic window
        ent = jnp.broadcast_to(ent_ref[j], (L, D))        # (L, D)
        row = jnp.concatenate([emb, ent], axis=-1)        # (L, 2D) lane-dense
        mask = (t_iota < n).astype(row.dtype)             # (L, 1)
        out_ref[j] = row * mask


def build_seq(embeds_mean, ent_sel, offs, lens, seq_len, *, bt=8):
    T, D = embeds_mean.shape
    B = ent_sel.shape[0]
    L = seq_len
    B_pad = _round_up(max(B, 1), bt)
    T_pad = _round_up(T + L, 8)        # pad so every L-row window stays in bounds

    emb_pad = jnp.zeros((T_pad, D), jnp.float32).at[:T].set(embeds_mean)
    ent_pad = jnp.zeros((B_pad, 1, D), jnp.float32).at[:B, 0].set(ent_sel)
    offs_pad = jnp.zeros((B_pad,), jnp.int32).at[:B].set(jnp.asarray(offs, jnp.int32))
    lens_pad = jnp.zeros((B_pad,), jnp.int32).at[:B].set(jnp.asarray(lens, jnp.int32))

    kernel = functools.partial(_seq_kernel, bt=bt, L=L, D=D)
    out = pl.pallas_call(
        kernel,
        out_shape=jax.ShapeDtypeStruct((B_pad, L, 2 * D), jnp.float32),
        grid_spec=pltpu.PrefetchScalarGridSpec(
            num_scalar_prefetch=2,     # offsets + lengths in SMEM
            grid=(B_pad // bt,),
            in_specs=[
                pl.BlockSpec((T_pad, D), lambda i, off, ln: (0, 0)),     # mean (resident)
                pl.BlockSpec((bt, 1, D), lambda i, off, ln: (i, 0, 0)),  # ent_embeds[s_tem]
            ],
            out_specs=pl.BlockSpec((bt, L, 2 * D), lambda i, off, ln: (i, 0, 0)),
        ),
        compiler_params=pltpu.CompilerParams(
            dimension_semantics=("parallel",),
            vmem_limit_bytes=48 * 1024 * 1024,
        ),
    )(offs_pad, lens_pad, emb_pad, ent_pad)
    return out[:B]


# ----------------------------------------------------------------------------
# Host glue (mirrors RE-Net utils.get_sorted_s_r_embed: inherently host-side)
# ----------------------------------------------------------------------------
def get_sorted_s_r_embed(s_hist, s, r, ent_embeds):
    lens = np.array([len(h) for h in s_hist], np.int64)
    order = np.argsort(-lens, kind="stable")
    keep = order[lens[order] > 0]
    s_len_non_zero = lens[keep]
    s_np, r_np = np.asarray(s), np.asarray(r)
    s_tem, r_tem = s_np[keep], r_np[keep]
    len_s, flat = [], []
    for j in keep:
        for neighs in s_hist[int(j)]:
            len_s.append(len(neighs))
            flat.extend(int(x) for x in neighs)
    embeds_stack = ent_embeds[jnp.asarray(flat, jnp.int32)]      # (M, D)
    return s_len_non_zero, s_tem, r_tem, embeds_stack, len_s


# ----------------------------------------------------------------------------
# Module wrapper
# ----------------------------------------------------------------------------
class MeanAggregatorPallas:
    """JAX/Pallas port of RE-Net MeanAggregator.forward (eval mode)."""

    def __init__(self, h_dim, dropout, seq_len=10, gcn=False, key=None):
        self.h_dim = h_dim
        self.dropout = dropout          # TODO(synk): eval-mode identity
        self.seq_len = seq_len
        self.gcn = gcn
        if gcn:
            k_w, k_b = jax.random.split(key)
            bound = 1.0 / float(np.sqrt(h_dim))
            self.w_gcn = jax.random.uniform(k_w, (h_dim, h_dim), jnp.float32, -bound, bound)
            self.b_gcn = jax.random.uniform(k_b, (1, h_dim), jnp.float32, -bound, bound)
        else:
            self.w_gcn = jnp.zeros((h_dim, h_dim), jnp.float32)
            self.b_gcn = jnp.zeros((1, h_dim), jnp.float32)

    def forward(self, s_hist, s, r, ent_embeds, rel_embeds):
        D, L = self.h_dim, self.seq_len
        (s_len_non_zero, s_tem, r_tem, embeds_stack, len_s) = get_sorted_s_r_embed(
            s_hist, s, r, ent_embeds)
        T = len(len_s)
        M = int(embeds_stack.shape[0])

        # dense segment mask (stand-in for the torch.sparse mask), host glue
        mask = np.zeros((T, M), np.float32)
        cur = 0
        for t, leng in enumerate(len_s):
            mask[t, cur:cur + leng] = 1.0
            cur += leng
        inv_len = (1.0 / np.asarray(len_s, np.float32)).reshape(T, 1)

        # Pallas kernel 1: neighbor-mean (+ fused gcn linear + relu)
        embeds_mean = seg_mean_gcn(jnp.asarray(mask), embeds_stack,
                                   jnp.asarray(inv_len), self.w_gcn, self.b_gcn,
                                   gcn=self.gcn)                            # (T, D)

        # per-sequence offsets into the flat (T, D) mean tensor (host glue)
        lens_b = np.asarray(s_len_non_zero, np.int32)
        offs_b = np.concatenate([[0], np.cumsum(lens_b)[:-1]]).astype(np.int32)
        ent_sel = ent_embeds[jnp.asarray(s_tem, jnp.int32)]                 # (B, D)

        # Pallas kernel 2: fused gather + concat + length mask -> (B, L, 2D)
        seq = build_seq(embeds_mean, ent_sel, offs_b, lens_b, L)

        # TODO(synk): nn.Dropout skipped (eval mode identity).
        # TODO(synk): pack_padded_sequence not representable; return padded + lengths.
        return seq, jnp.asarray(lens_b)


# ----------------------------------------------------------------------------
# Pure-JAX/numpy reference for verification
# ----------------------------------------------------------------------------
def _forward_ref(agg, s_hist, s, r, ent_embeds):
    D, L = agg.h_dim, agg.seq_len
    s_len_non_zero, s_tem, r_tem, embeds_stack, len_s = get_sorted_s_r_embed(
        s_hist, s, r, ent_embeds)
    T = len(len_s)
    M = int(embeds_stack.shape[0])
    mask = np.zeros((T, M), np.float32)
    cur = 0
    for t, leng in enumerate(len_s):
        mask[t, cur:cur + leng] = 1.0
        cur += leng
    mean = (jnp.asarray(mask) @ embeds_stack) / jnp.asarray(len_s, jnp.float32)[:, None]
    if agg.gcn:
        mean = jnp.maximum(mean @ agg.w_gcn + agg.b_gcn, 0.0)
    mean = np.asarray(mean)
    B = len(s_len_non_zero)
    offs = np.concatenate([[0], np.cumsum(s_len_non_zero)[:-1]]).astype(np.int64)
    ent_np = np.asarray(ent_embeds[jnp.asarray(s_tem, jnp.int32)])
    seq = np.zeros((B, L, 2 * D), np.float32)
    for i in range(B):
        n, o = int(s_len_non_zero[i]), int(offs[i])
        seq[i, :n, :D] = mean[o:o + n]
        seq[i, :n, D:] = ent_np[i]
    return seq, np.asarray(s_len_non_zero, np.int32)


# ----------------------------------------------------------------------------
if __name__ == "__main__":
    key = jax.random.PRNGKey(0)
    k_ent, k_rel, k_s, k_r, k_cnt, k_nid, k_gcn = jax.random.split(key, 7)

    h_dim, seq_len = 64, 8          # 2*h_dim = 128 -> lane-dense sequence output
    num_ents, num_rels = 40, 6
    num_subj = 5

    ent_embeds = jax.random.normal(k_ent, (num_ents, h_dim), jnp.float32)
    rel_embeds = jax.random.normal(k_rel, (num_rels, h_dim), jnp.float32)
    s = jax.random.randint(k_s, (num_subj,), 0, num_ents)
    r = jax.random.randint(k_r, (num_subj,), 0, num_rels)

    # ragged histories: fixed timestep counts, 1-5 random neighbor ids each
    hist_len = [4, 3, 0, 1, 2]                    # subject 2 has an empty history
    total_steps = sum(hist_len)
    counts = np.array(jax.random.randint(k_cnt, (total_steps,), 1, 6))
    nids = np.array(jax.random.randint(k_nid, (int(counts.sum()),), 0, num_ents))
    s_hist, c_ptr, n_ptr = [], 0, 0
    for j in range(num_subj):
        hist = []
        for _ in range(hist_len[j]):
            c = int(counts[c_ptr]); c_ptr += 1
            hist.append([int(x) for x in nids[n_ptr:n_ptr + c]]); n_ptr += c
        s_hist.append(hist)

    for gcn in (False, True):
        agg = MeanAggregatorPallas(h_dim, dropout=0.2, seq_len=seq_len,
                                   gcn=gcn, key=k_gcn)
        seq, lens = agg.forward(s_hist, s, r, ent_embeds, rel_embeds)
        jax.block_until_ready(seq)

        ref_seq, ref_lens = _forward_ref(agg, s_hist, s, r, ent_embeds)
        np.testing.assert_allclose(np.asarray(seq), ref_seq, rtol=1e-5, atol=1e-5)
        np.testing.assert_array_equal(np.asarray(lens), ref_lens)

    print("KERNEL_OK")
</pallas_src>

<mosaic_0001>
module attributes {stable_mosaic.version = 11 : i64} {
  func.func @_seg_mean_kernel(%arg0: i32, %arg1: i32, %arg2: memref<16x128xf32, #tpu.memory_space<vmem>>, %arg3: memref<128x64xf32, #tpu.memory_space<vmem>>, %arg4: memref<16x1xf32, #tpu.memory_space<vmem>>, %arg5: memref<16x64xf32, #tpu.memory_space<vmem>>) attributes {dimension_semantics = [#tpu.dimension_semantics<parallel>, #tpu.dimension_semantics<arbitrary>], iteration_bounds = array<i64: 1, 1>, scalar_prefetch = 0 : i64, scratch_operands = 0 : i64, tpu.core_type = #tpu.core_type<tc>, window_params = [{transform_indices = @transform_0, window_bounds = array<i64: 16, 128>}, {transform_indices = @transform_1, window_bounds = array<i64: 128, 64>}, {transform_indices = @transform_2, window_bounds = array<i64: 16, 1>}, {transform_indices = @transform_3, window_bounds = array<i64: 16, 64>}]} {
    %c0_i32 = arith.constant 0 : i32
    %0 = arith.cmpi eq, %arg1, %c0_i32 : i32
    %1 = arith.extui %0 : i1 to i32
    %c0_i32_0 = arith.constant 0 : i32
    %2 = arith.cmpi ne, %1, %c0_i32_0 : i32
    scf.if %2 {
      %cst_10 = arith.constant 0.000000e+00 : f32
      %12 = vector.broadcast %cst_10 : f32 to vector<16x64xf32>
      %c0_11 = arith.constant 0 : index
      %c0_12 = arith.constant 0 : index
      %13 = vector.load %arg5[%c0_11, %c0_12] : memref<16x64xf32, #tpu.memory_space<vmem>>, vector<16x64xf32>
      tpu.vector_store %arg5[%c0_11, %c0_12], %12 {strides = array<i32>} : memref<16x64xf32, #tpu.memory_space<vmem>>, vector<16x64xf32>,
    } else {
    }
    %c0 = arith.constant 0 : index
    %c0_1 = arith.constant 0 : index
    %3 = vector.load %arg5[%c0, %c0_1] : memref<16x64xf32, #tpu.memory_space<vmem>>, vector<16x64xf32>
    %c0_2 = arith.constant 0 : index
    %c0_3 = arith.constant 0 : index
    %4 = vector.load %arg2[%c0_2, %c0_3] : memref<16x128xf32, #tpu.memory_space<vmem>>, vector<16x128xf32>
    %c0_4 = arith.constant 0 : index
    %c0_5 = arith.constant 0 : index
    %5 = vector.load %arg3[%c0_4, %c0_5] : memref<128x64xf32, #tpu.memory_space<vmem>>, vector<128x64xf32>
    %cst = arith.constant dense<0.000000e+00> : vector<16x64xf32>
    %6 = tpu.matmul %4, %5, %cst {dimension_numbers = #tpu.dot_dimension_numbers<[1], [0], [0], [1], [0, 0, 1, 1], [], []>} : vector<16x128xf32>, vector<128x64xf32>, vector<16x64xf32> -> vector<16x64xf32>
    %7 = arith.addf %3, %6 : vector<16x64xf32>
    %c0_6 = arith.constant 0 : index
    %c0_7 = arith.constant 0 : index
    %8 = vector.load %arg5[%c0_6, %c0_7] : memref<16x64xf32, #tpu.memory_space<vmem>>, vector<16x64xf32>
    tpu.vector_store %arg5[%c0_6, %c0_7], %7 {strides = array<i32>} : memref<16x64xf32, #tpu.memory_space<vmem>>, vector<16x64xf32>,
    %c0_i32_8 = arith.constant 0 : i32
    %9 = arith.cmpi eq, %arg1, %c0_i32_8 : i32
    %10 = arith.extui %9 : i1 to i32
    %c0_i32_9 = arith.constant 0 : i32
    %11 = arith.cmpi ne, %10, %c0_i32_9 : i32
    scf.if %11 {
      %c0_10 = arith.constant 0 : index
      %c0_11 = arith.constant 0 : index
      %12 = vector.load %arg5[%c0_10, %c0_11] : memref<16x64xf32, #tpu.memory_space<vmem>>, vector<16x64xf32>
      %c0_12 = arith.constant 0 : index
      %c0_13 = arith.constant 0 : index
      %13 = vector.load %arg4[%c0_12, %c0_13] : memref<16x1xf32, #tpu.memory_space<vmem>>, vector<16x1xf32>
      %14 = vector.broadcast %13 : vector<16x1xf32> to vector<16x64xf32>
      %15 = arith.mulf %12, %14 : vector<16x64xf32>
      %c0_14 = arith.constant 0 : index
      %c0_15 = arith.constant 0 : index
      %16 = vector.load %arg5[%c0_14, %c0_15] : memref<16x64xf32, #tpu.memory_space<vmem>>, vector<16x64xf32>
      tpu.vector_store %arg5[%c0_14, %c0_15], %15 {strides = array<i32>} : memref<16x64xf32, #tpu.memory_space<vmem>>, vector<16x64xf32>,
    } else {
    }
    return
  }
  func.func @transform_0(%arg0: i32, %arg1: i32) -> (i32, i32) {
    %c0_i32 = arith.constant 0 : i32
    return %arg0, %arg1 : i32, i32
  }
  func.func @transform_1(%arg0: i32, %arg1: i32) -> (i32, i32) {
    %c0_i32 = arith.constant 0 : i32
    %c0_i32_0 = arith.constant 0 : i32
    return %arg1, %c0_i32 : i32, i32
  }
  func.func @transform_2(%arg0: i32, %arg1: i32) -> (i32, i32) {
    %c0_i32 = arith.constant 0 : i32
    %c0_i32_0 = arith.constant 0 : i32
    return %arg0, %c0_i32 : i32, i32
  }
  func.func @transform_3(%arg0: i32, %arg1: i32) -> (i32, i32) {
    %c0_i32 = arith.constant 0 : i32
    %c0_i32_0 = arith.constant 0 : i32
    return %arg0, %c0_i32 : i32, i32
  }
}

</mosaic_0001>

<llo_original>
// kernel: tpu_custom_call.1
$region0: #{tpu_custom_call.1}
  #allocation0 [shape = 'u32[]', space=smem, size = 0x4, offset = 0x4, fixed_abs, tag = 'smem constant byte address 0x4 - core index']
  #allocation1 [shape = 'u32[144,128]{1,0:T(1,128)}', space=vmem, size = 0x12000, scoped, tag = 'internal scratch']
  %s0 = inlined_call_operand.vmem [shape: f32[16,128], index: 0, kind: input, shape index: {}]
  %s1 = inlined_call_operand.vmem [shape: f32[128,64], index: 1, kind: input, shape index: {}]
  %s2 = inlined_call_operand.vmem [shape: f32[16,1], index: 2, kind: input, shape index: {}]
  %s3 = inlined_call_operand.hbm [shape: f32[16,64], index: 3, kind: output, shape index: {}]
  %s4 = sld [smem:[#allocation0]]
  $region30: #{tpu_custom_call.1} parent=0
    _
  %s6 = ssub.s32 1, %s4
  %s7 = scalar_select 0, %s6, %s4
  $region1: #{tpu_custom_call.1} parent=0
    #allocation2 [shape = 'u8[8192]{0}', space=vmem, size = 0x2000, scoped, tag = 'output window, operand 0, single buffered']
    #allocation3 [shape = 's32[1]{0}', space=sflag, size = 0x4, scoped, tag = 'scoped memory for tpu_custom_call.1']
    %8 = vsyncpa [#allocation3], 0
    // Predicated region
    $region2: #{tpu_custom_call.1} parent=1 // pred_check
      _
    $region3: #{tpu_custom_call.1} parent=1 // pred_check_branch
      %10 = sbr.rel (0) target = $region5
    $region4: #{tpu_custom_call.1} parent=1 // pred_region
      _
    $region5: #{tpu_custom_call.1} parent=1 // pred_fallthru
      _
    // Predicated region
    $region6: #{tpu_custom_call.1} parent=1 // pred_check
      _
    $region7: #{tpu_custom_call.1} parent=1 // pred_check_branch
      %12 = sbr.rel (0) target = $region9
    $region8: #{tpu_custom_call.1} parent=1 // pred_region
      _
    $region9: #{tpu_custom_call.1} parent=1 // pred_fallthru
      _
    // Predicated region
    $region10: #{tpu_custom_call.1} parent=1 // pred_check
      _
    $region11: #{tpu_custom_call.1} parent=1 // pred_check_branch
      %14 = sbr.rel (0) target = $region13
    $region12: #{tpu_custom_call.1} parent=1 // pred_region
      _
    $region13: #{tpu_custom_call.1} parent=1 // pred_fallthru
      _
    %p15 = scmp.eq.s32.totalorder 0, 0
    // Predicated region
    $region14: #{tpu_custom_call.1} parent=1 // pred_check
      %p16 = pneg %p15
    $region15: #{tpu_custom_call.1} parent=1 // pred_check_branch
      %18 = sbr.rel (%p16) target = $region17
    $region16: #{tpu_custom_call.1} parent=1 // pred_region
      %vm19 = vcmask 523264
      %20 = vst.msk [vmem:[#allocation2] sm:$0xff] %vm19, 0.0
      %21 = vst.msk [vmem:[#allocation2 + $0x8] sm:$0xff] %vm19, 0.0
    $region17: #{tpu_custom_call.1} parent=1 // pred_fallthru
      _
    %v22 = vld [vmem:[#allocation2] sm:$0xff]
    %v23 = vld [vmem:[#allocation2 + $0x8] sm:$0xff]
    %v24 = vld [vmem:[%s0] sm:$0xff]
    %v25 = vld [vmem:[%s0 + $0x8] sm:$0xff]
    %v26 = vld [vmem:[%s1] sm:$0xff]
    %v27 = vld [vmem:[%s1 + $0x8] sm:$0xff]
    %v28 = vld [vmem:[%s1 + $0x10] sm:$0xff]
    %v29 = vld [vmem:[%s1 + $0x18] sm:$0xff]
    %v30 = vld [vmem:[%s1 + $0x20] sm:$0xff]
    %v31 = vld [vmem:[%s1 + $0x28] sm:$0xff]
    %v32 = vld [vmem:[%s1 + $0x30] sm:$0xff]
    %v33 = vld [vmem:[%s1 + $0x38] sm:$0xff]
    %v34 = vld [vmem:[%s1 + $0x40] sm:$0xff]
    %v35 = vld [vmem:[%s1 + $0x48] sm:$0xff]
    %v36 = vld [vmem:[%s1 + $0x50] sm:$0xff]
    %v37 = vld [vmem:[%s1 + $0x58] sm:$0xff]
    %v38 = vld [vmem:[%s1 + $0x60] sm:$0xff]
    %v39 = vld [vmem:[%s1 + $0x68] sm:$0xff]
    %v40 = vld [vmem:[%s1 + $0x70] sm:$0xff]
    %v41 = vld [vmem:[%s1 + $0x78] sm:$0xff]
    %42 = vmatprep.subr.mxu0 0.0
    %43 = vmatpush1.msra.mxu0 %v26
    %44 = vmatprep.subr.mxu0 0.0
    %45 = vmatpush1.msra.mxu0 %v27
    %46 = vmatprep.subr.mxu0 0.0
    %47 = vmatpush1.msra.mxu0 %v28
    %48 = vmatprep.subr.mxu0 0.0
    %49 = vmatpush1.msra.mxu0 %v29
    %50 = vmatprep.subr.mxu0 0.0
    %51 = vmatpush1.msra.mxu0 %v30
    %52 = vmatprep.subr.mxu0 0.0
    %53 = vmatpush1.msra.mxu0 %v31
    %54 = vmatprep.subr.mxu0 0.0
    %55 = vmatpush1.msra.mxu0 %v32
    %56 = vmatprep.subr.mxu0 0.0
    %57 = vmatpush1.msra.mxu0 %v33
    %58 = vmatprep.subr.mxu0 0.0
    %59 = vmatpush1.msra.mxu0 %v34
    %60 = vmatprep.subr.mxu0 0.0
    %61 = vmatpush1.msra.mxu0 %v35
    %62 = vmatprep.subr.mxu0 0.0
    %63 = vmatpush1.msra.mxu0 %v36
    %64 = vmatprep.subr.mxu0 0.0
    %65 = vmatpush1.msra.mxu0 %v37
    %66 = vmatprep.subr.mxu0 0.0
    %67 = vmatpush1.msra.mxu0 %v38
    %68 = vmatprep.subr.mxu0 0.0
    %69 = vmatpush1.msra.mxu0 %v39
    %70 = vmatprep.subr.mxu0 0.0
    %71 = vmatpush1.msra.mxu0 %v40
    %72 = vmatprep.subr.mxu0 0.0
    %73 = vmatpush1.msra.mxu0 %v41
    %74 = vmatprep.subr.mxu0 0.0
    %75 = vmatpush1.msra.mxu0 0.0
    %76 = vmatprep.subr.mxu0 0.0
    %77 = vmatpush1.msra.mxu0 0.0
    %78 = vmatprep.subr.mxu0 0.0
    %79 = vmatpush1.msra.mxu0 0.0
    %80 = vmatprep.subr.mxu0 0.0
    %81 = vmatpush1.msra.mxu0 0.0
    %82 = vmatprep.subr.mxu0 0.0
    %83 = vmatpush1.msra.mxu0 0.0
    %84 = vmatprep.subr.mxu0 0.0
    %85 = vmatpush1.msra.mxu0 0.0
    %86 = vmatprep.subr.mxu0 0.0
    %87 = vmatpush1.msra.mxu0 0.0
    %88 = vmatprep.subr.mxu0 0.0
    %89 = vmatpush1.msra.mxu0 0.0
    %90 = vmatprep.subr.mxu0 0.0
    %91 = vmatpush1.msra.mxu0 0.0
    %92 = vmatprep.subr.mxu0 0.0
    %93 = vmatpush1.msra.mxu0 0.0
    %94 = vmatprep.subr.mxu0 0.0
    %95 = vmatpush1.msra.mxu0 0.0
    %96 = vmatprep.subr.mxu0 0.0
    %97 = vmatpush1.msra.mxu0 0.0
    %98 = vmatprep.subr.mxu0 0.0
    %99 = vmatpush1.msra.mxu0 0.0
    %100 = vmatprep.subr.mxu0 0.0
    %101 = vmatpush1.msra.mxu0 0.0
    %102 = vmatprep.subr.mxu0 0.0
    %103 = vmatpush1.msra.mxu0 0.0
    %104 = vmatprep.subr.mxu0 0.0
    %105 = vmatpush1.msra.mxu0 0.0
    %106 = vmatprep.mubr.f32.mxu0 0.0
    %107 = vmatmul.mubr.f32.gmra.mrb[0].mxu0 %v24
    %v108 = vpop.f32.mrb[0].mxu0
    %v109 = vadd.f32 0.0, %v108
    %v110 = vpop.f32.mrb[0].mxu0
    %111 = vmatprep.mubr.f32.mxu0 0.0
    %112 = vmatmul.mubr.f32.gmra.mrb[0].mxu0 %v25
    %v113 = vpop.f32.mrb[0].mxu0
    %v114 = vadd.f32 0.0, %v113
    %v115 = vpop.f32.mrb[0].mxu0
    %116 = vdwg.mxu0
    %v117 = vadd.f32 %v22, %v109
    %v118 = vadd.f32 %v23, %v114
    %vm119 = vcmask 523264
    %120 = vst.msk [vmem:[#allocation2] sm:$0xff] %vm119, %v117
    %121 = vst.msk [vmem:[#allocation2 + $0x8] sm:$0xff] %vm119, %v118
    // Predicated region
    $region18: #{tpu_custom_call.1} parent=1 // pred_check
      %p122 = pneg %p15
    $region19: #{tpu_custom_call.1} parent=1 // pred_check_branch
      %124 = sbr.rel (%p122) target = $region21
    $region20: #{tpu_custom_call.1} parent=1 // pred_region
      %v125 = vld [vmem:[#allocation2] sm:$0xff]
      %v126 = vld [vmem:[#allocation2 + $0x8] sm:$0xff]
      %v127 = vld [vmem:[%s2] sm:$0xff]
      %v128 = vld [vmem:[%s2 + $0x8] sm:$0xff]
      %130 = vset.pattern.permute.xlu0 0
      %131 = vperm.xlu0 %130, %v127
      %v132 = vpop.permute.xlu0 %131
      %135 = vset.pattern.permute.xlu0 0
      %136 = vperm.xlu0 %135, %v128
      %v137 = vpop.permute.xlu0 %136
      %v139 = vmul.f32 %v125, %v132
      %v140 = vmul.f32 %v126, %v137
      %141 = vst.msk [vmem:[#allocation2] sm:$0xff] %vm119, %v139
      %142 = vst.msk [vmem:[#allocation2 + $0x8] sm:$0xff] %vm119, %v140
    $region21: #{tpu_custom_call.1} parent=1 // pred_fallthru
      _
    // Predicated region
    $region22: #{tpu_custom_call.1} parent=1 // pred_check
      _
    $region23: #{tpu_custom_call.1} parent=1 // pred_check_branch
      %144 = sbr.rel (0) target = $region25
    $region24: #{tpu_custom_call.1} parent=1 // pred_region
      %s146 = ssub.s32 256, 256
      %147 = vsyncadd [#allocation3], %s146
      %s148 = sshll.u32 [#allocation2], 4
      %s149 = int_to_ptr.vmem [resolvable:$true] %s148
      %154 = dma.vmem_to_hbm [thread:$0]  %s149, 256, %s3, [#allocation3], 128, 128, 8
    $region25: #{tpu_custom_call.1} parent=1 // pred_fallthru
      _
    // Predicated region
    $region26: #{tpu_custom_call.1} parent=1 // pred_check
      _
    $region27: #{tpu_custom_call.1} parent=1 // pred_check_branch
      %156 = sbr.rel (0) target = $region29
    $region28: #{tpu_custom_call.1} parent=1 // pred_region
      %157 = dma.done [#allocation3], 256
    $region29: #{tpu_custom_call.1} parent=1 // pred_fallthru
      _
    %158 = vsyncpa [#allocation3], 1

</llo_original>
